<compile_context>
chip_gen: v7x
topology: tpu7x:2x2x1
jax: 0.10.0
libtpu: 0.0.40
codegen_flags: <defaults>
</compile_context>

<pallas_src>
import functools

import jax
import jax.numpy as jnp
from jax.experimental import pallas as pl
from jax.experimental.pallas import tpu as pltpu


def _stats_kernel(wc_ref, x_ref, sum_ref, sq_ref, *, n_out, n_in, length):
    """Accumulate per-output-channel sum / sum-of-squares of conv1x1(x) (no bias)."""
    @pl.when(pl.program_id(0) == 0)
    def _init():
        sum_ref[...] = jnp.zeros_like(sum_ref)
        sq_ref[...] = jnp.zeros_like(sq_ref)

    sums, sqs = [], []
    for o in range(n_out):
        acc = wc_ref[o, 0] * x_ref[:, 0:length].astype(jnp.float32)
        for c in range(1, n_in):
            acc = acc + wc_ref[o, c] * x_ref[:, c * length:(c + 1) * length].astype(jnp.float32)
        sums.append(jnp.sum(jnp.sum(acc, axis=1, keepdims=True), axis=0, keepdims=True))
        sqs.append(jnp.sum(jnp.sum(acc * acc, axis=1, keepdims=True), axis=0, keepdims=True))
    sum_row = sums[0] if n_out == 1 else jnp.concatenate(sums, axis=1)
    sq_row = sqs[0] if n_out == 1 else jnp.concatenate(sqs, axis=1)
    sum_ref[...] += sum_row
    sq_ref[...] += sq_row


def _apply_kernel(bias_ref, x_ref, w_ref, out_ref, *, neg_slope):
    """v = leaky_relu(x_tile @ w_folded + b_folded) for one batch tile."""
    x = x_ref[...].astype(jnp.float32)                      # (tm, C*L)
    v = jnp.sum(x * w_ref[...], axis=1, keepdims=True)      # (tm, 1) VPU mul + XLU reduce
    v = v + bias_ref[0]
    out_ref[...] = jnp.where(v >= 0.0, v, neg_slope * v)


def value_head_forward(x, params, *, eps=1e-5, neg_slope=0.01, batch_tile=256):
    """x: (N, C, L) with L = H*W  ->  (N, 1)."""
    wc = params["conv_w"][:, :, 0].astype(jnp.float32)      # (O, C)
    gamma = params["bn_gamma"].astype(jnp.float32)          # (O,)
    beta = params["bn_beta"].astype(jnp.float32)            # (O,)
    w1 = params["lin1_w"].astype(jnp.float32)               # (hidden, O*L)
    b1 = params["lin1_b"].astype(jnp.float32)               # (hidden,)
    w2 = params["lin2_w"].astype(jnp.float32)               # (1, hidden)
    b2 = params["lin2_b"].astype(jnp.float32)               # (1,)

    N, C, L = x.shape
    O = wc.shape[0]
    CL = C * L

    x2 = x.reshape(N, CL).astype(jnp.float32)               # row-major column c*L + l

    # Batch tiling.  Zero-padded rows are exact for the batch statistics because
    # the bias-free conv of a zero row is zero and the mean divides by the true N*L.
    if N <= batch_tile:
        tm, n_pad = N, N
    else:
        tm = batch_tile
        n_pad = ((N + tm - 1) // tm) * tm
    if n_pad != N:
        x2 = jnp.concatenate([x2, jnp.zeros((n_pad - N, CL), x2.dtype)], axis=0)
    nbt = n_pad // tm

    smem = pl.BlockSpec(memory_space=pltpu.MemorySpace.SMEM)
    vmem_limit = 32 * 1024 * 1024   # safe scoped limit on v5e/v6e/v7x

    # ---- pass 1: per-channel batch statistics of the 1x1 conv ---------------
    ysum, ysq = pl.pallas_call(
        functools.partial(_stats_kernel, n_out=O, n_in=C, length=L),
        out_shape=(jax.ShapeDtypeStruct((1, O), jnp.float32),
                   jax.ShapeDtypeStruct((1, O), jnp.float32)),
        grid=(nbt,),
        in_specs=[smem, pl.BlockSpec((tm, CL), lambda i: (i, 0))],
        out_specs=[pl.BlockSpec((1, O), lambda i: (0, 0)),
                   pl.BlockSpec((1, O), lambda i: (0, 0))],
        compiler_params=pltpu.CompilerParams(
            dimension_semantics=("arbitrary",), vmem_limit_bytes=vmem_limit),
    )(wc, x2)

    # ---- glue: parameter-sized algebra only (no data-proportional work) -----
    count = jnp.float32(N * L)
    mean = ysum[0] / count                                   # (O,) bias-free conv mean
    var = ysq[0] / count - mean * mean                       # (O,) biased variance
    scale = gamma * jax.lax.rsqrt(var + eps)                 # (O,)

    w_comb = (w2 @ w1).reshape(O, L)                         # Linear2 o Linear1 fold
    b_comb = (w2 @ b1)[0] + b2[0]
    w_eff = scale[:, None] * w_comb                          # (O, L) BN scale folded in
    b_eff = jnp.sum((beta - mean * scale)[:, None] * w_comb) + b_comb
    w_x = (wc.T @ w_eff).reshape(1, CL)                      # conv folded in -> (1, C*L)

    # ---- pass 2: v = leaky_relu(x2 @ w_x.T + b_eff), tiled over batch -------
    out_pad = pl.pallas_call(
        functools.partial(_apply_kernel, neg_slope=neg_slope),
        out_shape=jax.ShapeDtypeStruct((n_pad, 1), jnp.float32),
        grid=(nbt,),
        in_specs=[smem,
                  pl.BlockSpec((tm, CL), lambda i: (i, 0)),
                  pl.BlockSpec((1, CL), lambda i: (0, 0))],
        out_specs=pl.BlockSpec((tm, 1), lambda i: (i, 0)),
        compiler_params=pltpu.CompilerParams(
            dimension_semantics=("parallel",), vmem_limit_bytes=vmem_limit),
    )(jnp.reshape(b_eff, (1,)), x2, w_x)

    return out_pad[:N]


def value_head_reference(x, params, *, eps=1e-5, neg_slope=0.01):
    """Pure-JAX reference mirroring the torch forward (training-mode BN)."""
    wc = params["conv_w"][:, :, 0]
    y = jnp.einsum("oc,ncl->nol", wc, x) + params["conv_b"][None, :, None]
    mean = jnp.mean(y, axis=(0, 2), keepdims=True)
    var = jnp.mean((y - mean) ** 2, axis=(0, 2), keepdims=True)
    y = ((y - mean) / jnp.sqrt(var + eps)) * params["bn_gamma"][None, :, None] \
        + params["bn_beta"][None, :, None]
    flat = y.reshape(y.shape[0], -1)
    h = flat @ params["lin1_w"].T + params["lin1_b"]
    v = h @ params["lin2_w"].T + params["lin2_b"]
    return jnp.where(v >= 0.0, v, neg_slope * v)


def init_params(key, C, L, out_channels=1, hidden_features=64):
    k = jax.random.split(key, 8)
    return {
        "conv_w": 0.3 * jax.random.normal(k[0], (out_channels, C, 1), jnp.float32),
        "conv_b": 0.1 * jax.random.normal(k[1], (out_channels,), jnp.float32),
        "bn_gamma": 1.0 + 0.1 * jax.random.normal(k[2], (out_channels,), jnp.float32),
        "bn_beta": 0.1 * jax.random.normal(k[3], (out_channels,), jnp.float32),
        "lin1_w": 0.1 * jax.random.normal(k[4], (hidden_features, out_channels * L), jnp.float32),
        "lin1_b": 0.05 * jax.random.normal(k[5], (hidden_features,), jnp.float32),
        "lin2_w": 0.1 * jax.random.normal(k[6], (1, hidden_features), jnp.float32),
        "lin2_b": 0.05 * jax.random.normal(k[7], (1,), jnp.float32),
    }


if __name__ == "__main__":
    key = jax.random.PRNGKey(0)
    kx, kp, kx2, kp2 = jax.random.split(key, 4)

    # Small config: N=2, C=4, H=W=4 (L=16), out_channels=1, hidden=32.
    N, C, H, W = 2, 4, 4, 4
    L = H * W
    x = jax.random.normal(kx, (N, C, L), jnp.float32)
    params = init_params(kp, C, L, out_channels=1, hidden_features=32)

    out = jax.block_until_ready(value_head_forward(x, params))
    ref = jax.block_until_ready(value_head_reference(x, params))
    assert out.shape == (N, 1)
    assert jnp.allclose(out, ref, atol=5e-3, rtol=5e-3), (out, ref)

    # Exercise the gridded + padded batch path (37 real rows, 3 tiles of 16).
    N2 = 37
    x_big = jax.random.normal(kx2, (N2, C, L), jnp.float32)
    params2 = init_params(kp2, C, L, out_channels=1, hidden_features=32)
    out2 = jax.block_until_ready(value_head_forward(x_big, params2, batch_tile=16))
    ref2 = jax.block_until_ready(value_head_reference(x_big, params2))
    assert out2.shape == (N2, 1)
    assert jnp.allclose(out2, ref2, atol=5e-3, rtol=5e-3), (out2, ref2)

    print("KERNEL_OK")
</pallas_src>

<mosaic_0001>
module attributes {stable_mosaic.version = 11 : i64} {
  func.func @_stats_kernel(%arg0: i32, %arg1: memref<1x4xf32, #tpu.memory_space<smem>>, %arg2: memref<2x64xf32, #tpu.memory_space<vmem>>, %arg3: memref<1x1xf32, #tpu.memory_space<vmem>>, %arg4: memref<1x1xf32, #tpu.memory_space<vmem>>) attributes {dimension_semantics = [#tpu.dimension_semantics<arbitrary>], iteration_bounds = array<i64: 1>, scalar_prefetch = 0 : i64, scratch_operands = 0 : i64, tpu.core_type = #tpu.core_type<tc>, window_params = [{transform_indices = @transform_0, window_bounds = array<i64: 1, 4>}, {transform_indices = @transform_1, window_bounds = array<i64: 2, 64>}, {pipeline_mode = #tpu.pipeline_mode<synchronous>, transform_indices = @transform_2, window_bounds = array<i64: 1, 1>}, {pipeline_mode = #tpu.pipeline_mode<synchronous>, transform_indices = @transform_3, window_bounds = array<i64: 1, 1>}]} {
    %c0_i32 = arith.constant 0 : i32
    %0 = arith.cmpi eq, %arg0, %c0_i32 : i32
    %1 = arith.extui %0 : i1 to i32
    %c0_i32_0 = arith.constant 0 : i32
    %2 = arith.cmpi ne, %1, %c0_i32_0 : i32
    scf.if %2 {
      %cst_21 = arith.constant 0.000000e+00 : f32
      %37 = vector.broadcast %cst_21 : f32 to vector<1x1xf32>
      %c0_22 = arith.constant 0 : index
      %c0_23 = arith.constant 0 : index
      %38 = vector.load %arg3[%c0_22, %c0_23] : memref<1x1xf32, #tpu.memory_space<vmem>>, vector<1x1xf32>
      tpu.vector_store %arg3[%c0_22, %c0_23], %37 {strides = array<i32>} : memref<1x1xf32, #tpu.memory_space<vmem>>, vector<1x1xf32>,
      %cst_24 = arith.constant 0.000000e+00 : f32
      %39 = vector.broadcast %cst_24 : f32 to vector<1x1xf32>
      %c0_25 = arith.constant 0 : index
      %c0_26 = arith.constant 0 : index
      %40 = vector.load %arg4[%c0_25, %c0_26] : memref<1x1xf32, #tpu.memory_space<vmem>>, vector<1x1xf32>
      tpu.vector_store %arg4[%c0_25, %c0_26], %39 {strides = array<i32>} : memref<1x1xf32, #tpu.memory_space<vmem>>, vector<1x1xf32>,
    } else {
    }
    %c0 = arith.constant 0 : index
    %c0_1 = arith.constant 0 : index
    %3 = memref.load %arg1[%c0, %c0_1] : memref<1x4xf32, #tpu.memory_space<smem>>
    %c0_2 = arith.constant 0 : index
    %c0_3 = arith.constant 0 : index
    %4 = vector.load %arg2[%c0_2, %c0_3] : memref<2x64xf32, #tpu.memory_space<vmem>>, vector<2x16xf32>
    %5 = vector.broadcast %3 : f32 to vector<2x16xf32>
    %6 = arith.mulf %5, %4 : vector<2x16xf32>
    %c0_4 = arith.constant 0 : index
    %c1 = arith.constant 1 : index
    %7 = memref.load %arg1[%c0_4, %c1] : memref<1x4xf32, #tpu.memory_space<smem>>
    %c0_5 = arith.constant 0 : index
    %c16 = arith.constant 16 : index
    %8 = vector.load %arg2[%c0_5, %c16] : memref<2x64xf32, #tpu.memory_space<vmem>>, vector<2x16xf32>
    %9 = vector.broadcast %7 : f32 to vector<2x16xf32>
    %10 = arith.mulf %9, %8 : vector<2x16xf32>
    %11 = arith.addf %6, %10 : vector<2x16xf32>
    %c0_6 = arith.constant 0 : index
    %c2 = arith.constant 2 : index
    %12 = memref.load %arg1[%c0_6, %c2] : memref<1x4xf32, #tpu.memory_space<smem>>
    %c0_7 = arith.constant 0 : index
    %c32 = arith.constant 32 : index
    %13 = vector.load %arg2[%c0_7, %c32] : memref<2x64xf32, #tpu.memory_space<vmem>>, vector<2x16xf32>
    %14 = vector.broadcast %12 : f32 to vector<2x16xf32>
    %15 = arith.mulf %14, %13 : vector<2x16xf32>
    %16 = arith.addf %11, %15 : vector<2x16xf32>
    %c0_8 = arith.constant 0 : index
    %c3 = arith.constant 3 : index
    %17 = memref.load %arg1[%c0_8, %c3] : memref<1x4xf32, #tpu.memory_space<smem>>
    %c0_9 = arith.constant 0 : index
    %c48 = arith.constant 48 : index
    %18 = vector.load %arg2[%c0_9, %c48] : memref<2x64xf32, #tpu.memory_space<vmem>>, vector<2x16xf32>
    %19 = vector.broadcast %17 : f32 to vector<2x16xf32>
    %20 = arith.mulf %19, %18 : vector<2x16xf32>
    %21 = arith.addf %16, %20 : vector<2x16xf32>
    %cst = arith.constant dense<0.000000e+00> : vector<2xf32>
    %22 = vector.multi_reduction <add>, %21, %cst [1] : vector<2x16xf32> to vector<2xf32>
    %23 = vector.shape_cast %22 : vector<2xf32> to vector<2x1xf32>
    %cst_10 = arith.constant dense<0.000000e+00> : vector<1xf32>
    %24 = vector.multi_reduction <add>, %23, %cst_10 [0] : vector<2x1xf32> to vector<1xf32>
    %25 = vector.shape_cast %24 : vector<1xf32> to vector<1x1xf32>
    %26 = arith.mulf %21, %21 : vector<2x16xf32>
    %cst_11 = arith.constant dense<0.000000e+00> : vector<2xf32>
    %27 = vector.multi_reduction <add>, %26, %cst_11 [1] : vector<2x16xf32> to vector<2xf32>
    %28 = vector.shape_cast %27 : vector<2xf32> to vector<2x1xf32>
    %cst_12 = arith.constant dense<0.000000e+00> : vector<1xf32>
    %29 = vector.multi_reduction <add>, %28, %cst_12 [0] : vector<2x1xf32> to vector<1xf32>
    %30 = vector.shape_cast %29 : vector<1xf32> to vector<1x1xf32>
    %c0_13 = arith.constant 0 : index
    %c0_14 = arith.constant 0 : index
    %31 = vector.load %arg3[%c0_13, %c0_14] : memref<1x1xf32, #tpu.memory_space<vmem>>, vector<1x1xf32>
    %32 = arith.addf %31, %25 : vector<1x1xf32>
    %c0_15 = arith.constant 0 : index
    %c0_16 = arith.constant 0 : index
    %33 = vector.load %arg3[%c0_15, %c0_16] : memref<1x1xf32, #tpu.memory_space<vmem>>, vector<1x1xf32>
    tpu.vector_store %arg3[%c0_15, %c0_16], %32 {strides = array<i32>} : memref<1x1xf32, #tpu.memory_space<vmem>>, vector<1x1xf32>,
    %c0_17 = arith.constant 0 : index
    %c0_18 = arith.constant 0 : index
    %34 = vector.load %arg4[%c0_17, %c0_18] : memref<1x1xf32, #tpu.memory_space<vmem>>, vector<1x1xf32>
    %35 = arith.addf %34, %30 : vector<1x1xf32>
    %c0_19 = arith.constant 0 : index
    %c0_20 = arith.constant 0 : index
    %36 = vector.load %arg4[%c0_19, %c0_20] : memref<1x1xf32, #tpu.memory_space<vmem>>, vector<1x1xf32>
    tpu.vector_store %arg4[%c0_19, %c0_20], %35 {strides = array<i32>} : memref<1x1xf32, #tpu.memory_space<vmem>>, vector<1x1xf32>,
    return
  }
  func.func @transform_0(%arg0: i32) -> (i32, i32) {
    %c0_i32 = arith.constant 0 : i32
    %c0_i32_0 = arith.constant 0 : i32
    %c0_i32_1 = arith.constant 0 : i32
    return %c0_i32, %c0_i32_0 : i32, i32
  }
  func.func @transform_1(%arg0: i32) -> (i32, i32) {
    %c0_i32 = arith.constant 0 : i32
    %c0_i32_0 = arith.constant 0 : i32
    return %arg0, %c0_i32 : i32, i32
  }
  func.func @transform_2(%arg0: i32) -> (i32, i32) {
    %c0_i32 = arith.constant 0 : i32
    %c0_i32_0 = arith.constant 0 : i32
    %c0_i32_1 = arith.constant 0 : i32
    return %c0_i32, %c0_i32_0 : i32, i32
  }
  func.func @transform_3(%arg0: i32) -> (i32, i32) {
    %c0_i32 = arith.constant 0 : i32
    %c0_i32_0 = arith.constant 0 : i32
    %c0_i32_1 = arith.constant 0 : i32
    return %c0_i32, %c0_i32_0 : i32, i32
  }
}

</mosaic_0001>

<llo_original>
// kernel: tpu_custom_call.1
$region0: #{tpu_custom_call.1}
  #allocation0 [shape = 'u32[]', space=smem, size = 0x4, offset = 0x4, fixed_abs, tag = 'smem constant byte address 0x4 - core index']
  #allocation1 [shape = 'u32[144,128]{1,0:T(1,128)}', space=vmem, size = 0x12000, scoped, tag = 'internal scratch']
  %s0 = inlined_call_operand.hbm [shape: f32[1,4], index: 0, kind: input, shape index: {}]
  %s1 = inlined_call_operand.vmem [shape: f32[2,64], index: 1, kind: input, shape index: {}]
  %s2 = inlined_call_operand.hbm [shape: f32[1,1], index: 2, kind: output, shape index: {0}]
  %s3 = inlined_call_operand.hbm [shape: f32[1,1], index: 3, kind: output, shape index: {1}]
  %4 = xla_tuple %s2, %s3
  %s5 = sld [smem:[#allocation0]]
  $region34: #{tpu_custom_call.1} parent=0
    _
  %s7 = ssub.s32 1, %s5
  %s8 = scalar_select 0, %s7, %s5
  $region1: #{tpu_custom_call.1} parent=0
    #allocation2 [shape = 'u8[512]{0}', space=smem, size = 0x200, scoped, tag = 'input window, operand 0, single buffered']
    #allocation3 [shape = 's32[1]{0}', space=sflag, size = 0x4, scoped, tag = 'scoped memory for tpu_custom_call.1']
    #allocation4 [shape = 's32[1]{0}', space=sflag, size = 0x4, scoped, tag = 'scoped memory for tpu_custom_call.1']
    #allocation5 [shape = 'u8[512]{0}', space=vmem, size = 0x400, scoped, tag = 'output window, operand 0, single buffered']
    #allocation6 [shape = 'u8[512]{0}', space=vmem, size = 0x400, scoped, tag = 'output window, operand 1, single buffered']
    #allocation7 [shape = 's32[1]{0}', space=sflag, size = 0x4, scoped, tag = 'scoped memory for tpu_custom_call.1']
    %9 = vsyncpa [#allocation4], 0
    %10 = vsyncpa [#allocation3], 0
    %11 = vsyncpa [#allocation7], 0
    // Predicated region
    $region2: #{tpu_custom_call.1} parent=1 // pred_check
      _
    $region3: #{tpu_custom_call.1} parent=1 // pred_check_branch
      %13 = sbr.rel (0) target = $region5
    $region4: #{tpu_custom_call.1} parent=1 // pred_region
      %s15 = ssub.s32 16, 16
      %16 = vsyncadd [#allocation4], %s15
      %19 = dma.hbm_to_smem %s0, 16, [#allocation2], [#allocation4]
    $region5: #{tpu_custom_call.1} parent=1 // pred_fallthru
      _
    // Predicated region
    $region6: #{tpu_custom_call.1} parent=1 // pred_check
      _
    $region7: #{tpu_custom_call.1} parent=1 // pred_check_branch
      %21 = sbr.rel (0) target = $region9
    $region8: #{tpu_custom_call.1} parent=1 // pred_region
      _
    $region9: #{tpu_custom_call.1} parent=1 // pred_fallthru
      _
    // Predicated region
    $region10: #{tpu_custom_call.1} parent=1 // pred_check
      _
    $region11: #{tpu_custom_call.1} parent=1 // pred_check_branch
      %23 = sbr.rel (0) target = $region13
    $region12: #{tpu_custom_call.1} parent=1 // pred_region
      %24 = dma.done [#allocation4], 16
    $region13: #{tpu_custom_call.1} parent=1 // pred_fallthru
      _
    %25 = sfence
    %p26 = scmp.eq.s32.totalorder 0, 0
    // Predicated region
    $region14: #{tpu_custom_call.1} parent=1 // pred_check
      %p27 = pneg %p26
    $region15: #{tpu_custom_call.1} parent=1 // pred_check_branch
      %29 = sbr.rel (%p27) target = $region17
    $region16: #{tpu_custom_call.1} parent=1 // pred_region
      %vm30 = vcmask 0
      %31 = vst.msk [vmem:[#allocation5] sm:$0x1] %vm30, 0.0
      %32 = vst.msk [vmem:[#allocation6] sm:$0x1] %vm30, 0.0
    $region17: #{tpu_custom_call.1} parent=1 // pred_fallthru
      _
    %s33 = sld [smem:[#allocation2]]
    %v34 = vld [vmem:[%s1] sm:$0x3]
    %v35 = vstv %s33
    %v36 = vmul.f32 %v35, %v34
    %s37 = sld [smem:[#allocation2 + $0x1]]
    %v38 = vstv %s37
    %v39 = vmul.f32 %v38, %v34
    %41 = vrot.lane.b32.xlu0 %v39, 112
    %v42 = vpop.permute.xlu0 %41
    %v44 = vadd.f32 %v36, %v42
    %s45 = sld [smem:[#allocation2 + $0x2]]
    %v46 = vstv %s45
    %v47 = vmul.f32 %v46, %v34
    %49 = vrot.lane.b32.xlu0 %v47, 96
    %v50 = vpop.permute.xlu0 %49
    %v52 = vadd.f32 %v44, %v50
    %s53 = sld [smem:[#allocation2 + $0x3]]
    %v54 = vstv %s53
    %v55 = vmul.f32 %v54, %v34
    %57 = vrot.lane.b32.xlu0 %v55, 80
    %v58 = vpop.permute.xlu0 %57
    %v60 = vadd.f32 %v52, %v58
    %vm61 = vcmask 123904
    %v62 = vsel %vm61, %v60, 0.0
    %63 = vadd.xlane.f32.xlu0 %v62
    %v64 = vpop.xlane.xlu0 %63
    %vm65 = vcmask 1041408
    %v66 = vsel %vm65, %v64, 0.0
    %v67 = vrot.slane %v66, 4
    %v68 = vadd.f32 %v66, %v67
    %v69 = vrot.slane %v68, 2
    %v70 = vadd.f32 %v68, %v69
    %v71 = vrot.slane %v70, 1
    %v72 = vadd.f32 %v70, %v71
    %v73 = vmul.f32 %v60, %v60
    %v74 = vsel %vm61, %v73, 0.0
    %75 = vadd.xlane.f32.xlu0 %v74
    %v76 = vpop.xlane.xlu0 %75
    %v77 = vsel %vm65, %v76, 0.0
    %v78 = vrot.slane %v77, 4
    %v79 = vadd.f32 %v77, %v78
    %v80 = vrot.slane %v79, 2
    %v81 = vadd.f32 %v79, %v80
    %v82 = vrot.slane %v81, 1
    %v83 = vadd.f32 %v81, %v82
    %v84 = vld [vmem:[#allocation5] sm:$0x1]
    %v85 = vadd.f32 %v84, %v72
    %vm86 = vcmask 0
    %87 = vst.msk [vmem:[#allocation5] sm:$0x1] %vm86, %v85
    %v88 = vld [vmem:[#allocation6] sm:$0x1]
    %v89 = vadd.f32 %v88, %v83
    %90 = vst.msk [vmem:[#allocation6] sm:$0x1] %vm86, %v89
    // Predicated region
    $region18: #{tpu_custom_call.1} parent=1 // pred_check
      _
    $region19: #{tpu_custom_call.1} parent=1 // pred_check_branch
      %92 = sbr.rel (0) target = $region21
    $region20: #{tpu_custom_call.1} parent=1 // pred_region
      %s94 = ssub.s32 16, 16
      %95 = vsyncadd [#allocation3], %s94
      %s97 = sshll.u32 [#allocation5], 4
      %s98 = int_to_ptr.vmem [resolvable:$true] %s97
      %100 = dma.vmem_to_hbm [thread:$0]  %s98, 16, %s2, [#allocation3]
    $region21: #{tpu_custom_call.1} parent=1 // pred_fallthru
      _
    // Predicated region
    $region22: #{tpu_custom_call.1} parent=1 // pred_check
      _
    $region23: #{tpu_custom_call.1} parent=1 // pred_check_branch
      %102 = sbr.rel (0) target = $region25
    $region24: #{tpu_custom_call.1} parent=1 // pred_region
      %s104 = ssub.s32 16, 16
      %105 = vsyncadd [#allocation7], %s104
      %s107 = sshll.u32 [#allocation6], 4
      %s108 = int_to_ptr.vmem [resolvable:$true] %s107
      %110 = dma.vmem_to_hbm [thread:$0]  %s108, 16, %s3, [#allocation7]
    $region25: #{tpu_custom_call.1} parent=1 // pred_fallthru
      _
    // Predicated region
    $region26: #{tpu_custom_call.1} parent=1 // pred_check
      _
    $region27: #{tpu_custom_call.1} parent=1 // pred_check_branch
      %112 = sbr.rel (0) target = $region29
    $region28: #{tpu_custom_call.1} parent=1 // pred_region
      %113 = dma.done [#allocation3], 16
    $region29: #{tpu_custom_call.1} parent=1 // pred_fallthru
      _
    // Predicated region
    $region30: #{tpu_custom_call.1} parent=1 // pred_check
      _
    $region31: #{tpu_custom_call.1} parent=1 // pred_check_branch
      %115 = sbr.rel (0) target = $region33
    $region32: #{tpu_custom_call.1} parent=1 // pred_region
      %116 = dma.done [#allocation7], 16
    $region33: #{tpu_custom_call.1} parent=1 // pred_fallthru
      _
    %117 = vsyncpa [#allocation3], 1
    %118 = vsyncpa [#allocation7], 1
    %119 = vsyncpa [#allocation4], 1

</llo_original>
